<compile_context>
chip_gen: v7x
topology: tpu7x:2x2x1
jax: 0.10.0
libtpu: 0.0.40
codegen_flags: <defaults>
</compile_context>

<pallas_src>
import math
import re

import jax
import jax.numpy as jnp
from jax import lax
from jax.experimental import pallas as pl
from jax.experimental.pallas import tpu as pltpu


def _round_up(x, m):
    return ((x + m - 1) // m) * m


def _tpu_generation():
    """Best-effort TPU generation (5, 6, 7, ...); 0 if unknown."""
    try:
        kind = jax.devices()[0].device_kind.lower()
    except Exception:
        return 0
    m = re.search(r"(\d+)", kind)
    return int(m.group(1)) if m else 0


def _make_kernel(sub, n_sub, input_dim, compute_dtype, unroll):
    """Fused-MLP kernel for one (input_dim, tile) transposed batch block."""
    use_vpu_l1 = input_dim <= 8

    def kernel(x_ref,
               w1_ref, b1_ref,
               w2_ref, b2_ref,
               w3_ref, b3_ref,
               w4_ref, b4_ref,
               o_ref):
        # Weights/biases are tiny, whole-array VMEM-resident blocks with a
        # constant index map, and are already pre-cast in the wrapper, so this
        # is just a register/VMEM load once per grid step.
        w1 = w1_ref[...]          # (64, input_dim)
        w2 = w2_ref[...]          # (32, 64)   compute_dtype
        w3 = w3_ref[...]          # (64, 32)   compute_dtype
        w4 = w4_ref[...]          # (out, 64)  compute_dtype
        b1 = b1_ref[...]          # (64, 1)  f32
        b2 = b2_ref[...]          # (32, 1)  f32
        b3 = b3_ref[...]          # (64, 1)  f32
        b4 = b4_ref[...]          # (out, 1) f32
        # NOTE: biases are kept as (N, 1); the (N, sub) lane-splat happens in
        # the `+ b` below.  Materializing all four (N, sub) f32 broadcasts up
        # front would pin ~40 vregs across the loop and spill the 64-entry
        # register file at sub=256 — the splats are loop-invariant, so the LLO
        # scheduler can hoist/fuse them cheaply anyway.

        def body(s, carry):
            col = pl.multiple_of(s * sub, sub)
            x = x_ref[:, pl.ds(col, sub)]          # (input_dim, sub) f32

            # Layer 1: K = input_dim (e.g. 4) -> exact f32 VPU multiply-adds
            # instead of a (K/K_pad)-empty MXU push.
            if use_vpu_l1:
                pre = b1 + w1[:, 0:1] * x[0:1, :]
                for k in range(1, input_dim):
                    pre = pre + w1[:, k:k + 1] * x[k:k + 1, :]
            else:
                pre = jnp.dot(w1, x.astype(compute_dtype),
                              preferred_element_type=jnp.float32) + b1
            h = jnp.tanh(pre.astype(compute_dtype))          # (64, sub)

            pre = jnp.dot(w2, h, preferred_element_type=jnp.float32) + b2
            h = jnp.tanh(pre.astype(compute_dtype))          # (32, sub)

            pre = jnp.dot(w3, h, preferred_element_type=jnp.float32) + b3
            h = jnp.tanh(pre.astype(compute_dtype))          # (64, sub)

            out = jnp.dot(w4, h, preferred_element_type=jnp.float32) + b4

            # Lane-dense store: out_dim sublanes x sub (>=128) lanes.
            o_ref[:, pl.ds(col, sub)] = out.astype(o_ref.dtype)
            return carry

        # Partial unroll keeps LLO scheduling visibility without spilling when
        # the tile holds many sub-chunks.
        lax.fori_loop(0, n_sub, body, 0, unroll=unroll)

    return kernel


def two_body_interaction_forward(r, params, *, batch_tile=2048, sub_tile=None,
                                 compute_dtype=None):
    """Runs the TwoBodyInteraction MLP forward pass via pallas_call.

    r:       (B, input_dim) float32 (B may be ragged; it is zero-padded).
    params:  dict with w1..w4 as (in, out) and b1..b4 as (1, out).
    compute_dtype: matmul/tanh dtype.  None -> auto: bfloat16 on v6e/v7x,
             float32 otherwise (accumulation is always f32).
    sub_tile: lane width of each in-kernel sub-chunk.  None -> auto: 256 on
             v6e/v7x (fills the 256-wide MXU), 128 otherwise.
    """
    B, input_dim = r.shape

    gen = _tpu_generation()
    if compute_dtype is None:
        compute_dtype = jnp.bfloat16 if gen >= 6 else jnp.float32
    if sub_tile is None:
        sub_tile = 256 if gen >= 6 else 128

    w1, b1 = params["w1"], params["b1"]
    w2, b2 = params["w2"], params["b2"]
    w3, b3 = params["w3"], params["b3"]
    w4, b4 = params["w4"], params["b4"]
    out_dim = w4.shape[1]
    use_vpu_l1 = input_dim <= 8

    # --- pre-transpose / pre-cast parameters (done once, outside the kernel) -
    w1t = w1.T.astype(jnp.float32 if use_vpu_l1 else compute_dtype)  # (64, in)
    w2t = w2.T.astype(compute_dtype)                                 # (32, 64)
    w3t = w3.T.astype(compute_dtype)                                 # (64, 32)
    w4t = w4.T.astype(compute_dtype)                                 # (out, 64)
    b1t = b1.reshape(-1, 1).astype(jnp.float32)                      # (64, 1)
    b2t = b2.reshape(-1, 1).astype(jnp.float32)
    b3t = b3.reshape(-1, 1).astype(jnp.float32)
    b4t = b4.reshape(-1, 1).astype(jnp.float32)

    # --- batch tiling (batch rides the lane axis -> multiples of 128) --------
    sub = _round_up(min(sub_tile, _round_up(B, 128)), 128)
    tile = _round_up(min(batch_tile, _round_up(B, sub)), sub)
    num_tiles = pl.cdiv(B, tile)
    # Keep >= 4 grid steps when there is enough work: >= 2 per v7x TensorCore,
    # and 2-deep BlockSpec pipelining on single-TC v5e/v6e.
    min_steps = 4
    if num_tiles < min_steps and B >= min_steps * sub:
        tile = max(sub, (B // min_steps) // sub * sub)
        num_tiles = pl.cdiv(B, tile)
    n_sub = tile // sub
    unroll = n_sub if n_sub <= 4 else 2

    b_pad = num_tiles * tile
    r_t = r.T                                           # (input_dim, B)
    if b_pad != B:
        r_t = jnp.pad(r_t, ((0, 0), (0, b_pad - B)))

    # --- cost estimate (advisory) --------------------------------------------
    mm_flops = 2 * (input_dim * w1.shape[1]
                    + w2.shape[0] * w2.shape[1]
                    + w3.shape[0] * w3.shape[1]
                    + w4.shape[0] * w4.shape[1])
    n_tanh = w1.shape[1] + w2.shape[1] + w3.shape[1]
    param_bytes = sum(int(p.size) * p.dtype.itemsize
                      for p in (w1t, b1t, w2t, b2t, w3t, b3t, w4t, b4t))
    cost = pl.CostEstimate(
        flops=int(b_pad * mm_flops),
        transcendentals=int(b_pad * n_tanh),
        bytes_accessed=int(b_pad * (input_dim + out_dim) * 4
                           + num_tiles * param_bytes),
    )

    kernel = _make_kernel(sub, n_sub, input_dim, compute_dtype, unroll)

    def const_spec(arr):
        # Whole-array block, same block index every grid step -> VMEM resident.
        return pl.BlockSpec(arr.shape, lambda i: (0, 0))

    out_t = pl.pallas_call(
        kernel,
        out_shape=jax.ShapeDtypeStruct((out_dim, b_pad), jnp.float32),
        grid_spec=pltpu.PrefetchScalarGridSpec(
            num_scalar_prefetch=0,
            grid=(num_tiles,),
            in_specs=[
                pl.BlockSpec((input_dim, tile), lambda i: (0, i)),
                const_spec(w1t), const_spec(b1t),
                const_spec(w2t), const_spec(b2t),
                const_spec(w3t), const_spec(b3t),
                const_spec(w4t), const_spec(b4t),
            ],
            out_specs=pl.BlockSpec((out_dim, tile), lambda i: (0, i)),
        ),
        compiler_params=pltpu.CompilerParams(
            dimension_semantics=("parallel",),
            vmem_limit_bytes=32 * 1024 * 1024,
        ),
        cost_estimate=cost,
    )(r_t, w1t, b1t, w2t, b2t, w3t, b3t, w4t, b4t)

    out_t = out_t if b_pad == B else out_t[:, :B]
    return out_t.T                                      # (B, out_dim)


def init_params(key, input_dim):
    """Deterministic init mirroring torch.nn.Linear defaults:
    U(-1/sqrt(fan_in), 1/sqrt(fan_in)) for both weight and bias."""
    dims = [input_dim, 64, 32, 64, 5]
    params = {}
    for idx in range(4):
        fan_in, fan_out = dims[idx], dims[idx + 1]
        key, kw, kb = jax.random.split(key, 3)
        bound = 1.0 / math.sqrt(fan_in)
        params[f"w{idx + 1}"] = jax.random.uniform(
            kw, (fan_in, fan_out), jnp.float32, -bound, bound)
        params[f"b{idx + 1}"] = jax.random.uniform(
            kb, (1, fan_out), jnp.float32, -bound, bound)
    return params


def reference_forward(r, params):
    h = r
    for idx in range(1, 4):
        h = jnp.tanh(h @ params[f"w{idx}"] + params[f"b{idx}"])
    return h @ params["w4"] + params["b4"]


# TODO(synk): predict_mobility / predict_velocity (L1/L2/L3 mobility-matrix
# assembly + bmm) are outside forward() and are not implemented here.

if __name__ == "__main__":
    key = jax.random.PRNGKey(0)
    k_params, k_x1, k_x2 = jax.random.split(key, 3)

    input_dim = 4   # X = [d_vec(3), r(1)] per the predict_mobility usage
    params = init_params(k_params, input_dim)

    # 1) Small batch (single grid step), exact-f32 compute path.
    r_small = jax.random.normal(k_x1, (16, input_dim), jnp.float32)
    out_small = jax.block_until_ready(
        two_body_interaction_forward(r_small, params,
                                     compute_dtype=jnp.float32))
    ref_small = reference_forward(r_small, params)
    assert out_small.shape == (16, 5)
    assert jnp.allclose(out_small, ref_small, atol=1e-4, rtol=1e-4)

    # 2) Ragged batch exercising zero-padding + a multi-step parallel grid.
    r_big = jax.random.normal(k_x2, (200, input_dim), jnp.float32)
    out_big = jax.block_until_ready(
        two_body_interaction_forward(r_big, params, batch_tile=128,
                                     sub_tile=128, compute_dtype=jnp.float32))
    ref_big = reference_forward(r_big, params)
    assert out_big.shape == (200, 5)
    assert jnp.allclose(out_big, ref_big, atol=1e-4, rtol=1e-4)

    # 3) Auto defaults (bf16 tanh/matmul inputs on v6e/v7x) -> loose tolerance.
    out_auto = jax.block_until_ready(
        two_body_interaction_forward(r_big, params))
    assert out_auto.shape == (200, 5)
    assert jnp.allclose(out_auto, ref_big, atol=5e-2, rtol=5e-2)

    print("KERNEL_OK")
</pallas_src>

<mosaic_0001>
module attributes {stable_mosaic.version = 11 : i64} {
  func.func @kernel(%arg0: i32, %arg1: memref<4x128xf32, #tpu.memory_space<vmem>>, %arg2: memref<64x4xf32, #tpu.memory_space<vmem>>, %arg3: memref<64x1xf32, #tpu.memory_space<vmem>>, %arg4: memref<32x64xf32, #tpu.memory_space<vmem>>, %arg5: memref<32x1xf32, #tpu.memory_space<vmem>>, %arg6: memref<64x32xf32, #tpu.memory_space<vmem>>, %arg7: memref<64x1xf32, #tpu.memory_space<vmem>>, %arg8: memref<5x64xf32, #tpu.memory_space<vmem>>, %arg9: memref<5x1xf32, #tpu.memory_space<vmem>>, %arg10: memref<5x128xf32, #tpu.memory_space<vmem>>) attributes {dimension_semantics = [#tpu.dimension_semantics<parallel>], iteration_bounds = array<i64: 1>, scalar_prefetch = 0 : i64, scratch_operands = 0 : i64, tpu.core_type = #tpu.core_type<tc>, window_params = [{transform_indices = @transform_0, window_bounds = array<i64: 4, 128>}, {pipeline_mode = #tpu.pipeline_mode<synchronous>, transform_indices = @transform_1, window_bounds = array<i64: 64, 4>}, {pipeline_mode = #tpu.pipeline_mode<synchronous>, transform_indices = @transform_2, window_bounds = array<i64: 64, 1>}, {pipeline_mode = #tpu.pipeline_mode<synchronous>, transform_indices = @transform_3, window_bounds = array<i64: 32, 64>}, {pipeline_mode = #tpu.pipeline_mode<synchronous>, transform_indices = @transform_4, window_bounds = array<i64: 32, 1>}, {pipeline_mode = #tpu.pipeline_mode<synchronous>, transform_indices = @transform_5, window_bounds = array<i64: 64, 32>}, {pipeline_mode = #tpu.pipeline_mode<synchronous>, transform_indices = @transform_6, window_bounds = array<i64: 64, 1>}, {pipeline_mode = #tpu.pipeline_mode<synchronous>, transform_indices = @transform_7, window_bounds = array<i64: 5, 64>}, {pipeline_mode = #tpu.pipeline_mode<synchronous>, transform_indices = @transform_8, window_bounds = array<i64: 5, 1>}, {transform_indices = @transform_9, window_bounds = array<i64: 5, 128>}]} {
    %c0 = arith.constant 0 : index
    %c0_0 = arith.constant 0 : index
    %0 = vector.load %arg2[%c0, %c0_0] : memref<64x4xf32, #tpu.memory_space<vmem>>, vector<64x4xf32>
    %c0_1 = arith.constant 0 : index
    %c0_2 = arith.constant 0 : index
    %1 = vector.load %arg4[%c0_1, %c0_2] : memref<32x64xf32, #tpu.memory_space<vmem>>, vector<32x64xf32>
    %c0_3 = arith.constant 0 : index
    %c0_4 = arith.constant 0 : index
    %2 = vector.load %arg6[%c0_3, %c0_4] : memref<64x32xf32, #tpu.memory_space<vmem>>, vector<64x32xf32>
    %c0_5 = arith.constant 0 : index
    %c0_6 = arith.constant 0 : index
    %3 = vector.load %arg8[%c0_5, %c0_6] : memref<5x64xf32, #tpu.memory_space<vmem>>, vector<5x64xf32>
    %c0_7 = arith.constant 0 : index
    %c0_8 = arith.constant 0 : index
    %4 = vector.load %arg3[%c0_7, %c0_8] : memref<64x1xf32, #tpu.memory_space<vmem>>, vector<64x1xf32>
    %c0_9 = arith.constant 0 : index
    %c0_10 = arith.constant 0 : index
    %5 = vector.load %arg5[%c0_9, %c0_10] : memref<32x1xf32, #tpu.memory_space<vmem>>, vector<32x1xf32>
    %c0_11 = arith.constant 0 : index
    %c0_12 = arith.constant 0 : index
    %6 = vector.load %arg7[%c0_11, %c0_12] : memref<64x1xf32, #tpu.memory_space<vmem>>, vector<64x1xf32>
    %c0_13 = arith.constant 0 : index
    %c0_14 = arith.constant 0 : index
    %7 = vector.load %arg9[%c0_13, %c0_14] : memref<5x1xf32, #tpu.memory_space<vmem>>, vector<5x1xf32>
    %c0_i32 = arith.constant 0 : i32
    %c128_i32 = arith.constant 128 : i32
    %8 = arith.muli %c0_i32, %c128_i32 : i32
    %9 = tpu.assume_multiple %8, 128 : i32
    %c0_15 = arith.constant 0 : index
    %10 = arith.index_cast %9 : i32 to index
    %11 = vector.load %arg1[%c0_15, %10] : memref<4x128xf32, #tpu.memory_space<vmem>>, vector<4x128xf32>
    %12 = vector.extract_strided_slice %0 {offsets = [0, 0], sizes = [64, 1], strides = [1, 1]} : vector<64x4xf32> to vector<64x1xf32>
    %13 = vector.extract_strided_slice %11 {offsets = [0, 0], sizes = [1, 128], strides = [1, 1]} : vector<4x128xf32> to vector<1x128xf32>
    %14 = vector.broadcast %12 : vector<64x1xf32> to vector<64x128xf32>
    %15 = vector.broadcast %13 : vector<1x128xf32> to vector<64x128xf32>
    %16 = arith.mulf %14, %15 : vector<64x128xf32>
    %17 = vector.broadcast %4 : vector<64x1xf32> to vector<64x128xf32>
    %18 = arith.addf %17, %16 : vector<64x128xf32>
    %19 = vector.extract_strided_slice %0 {offsets = [0, 1], sizes = [64, 1], strides = [1, 1]} : vector<64x4xf32> to vector<64x1xf32>
    %20 = vector.extract_strided_slice %11 {offsets = [1, 0], sizes = [1, 128], strides = [1, 1]} : vector<4x128xf32> to vector<1x128xf32>
    %21 = vector.broadcast %19 : vector<64x1xf32> to vector<64x128xf32>
    %22 = vector.broadcast %20 : vector<1x128xf32> to vector<64x128xf32>
    %23 = arith.mulf %21, %22 : vector<64x128xf32>
    %24 = arith.addf %18, %23 : vector<64x128xf32>
    %25 = vector.extract_strided_slice %0 {offsets = [0, 2], sizes = [64, 1], strides = [1, 1]} : vector<64x4xf32> to vector<64x1xf32>
    %26 = vector.extract_strided_slice %11 {offsets = [2, 0], sizes = [1, 128], strides = [1, 1]} : vector<4x128xf32> to vector<1x128xf32>
    %27 = vector.broadcast %25 : vector<64x1xf32> to vector<64x128xf32>
    %28 = vector.broadcast %26 : vector<1x128xf32> to vector<64x128xf32>
    %29 = arith.mulf %27, %28 : vector<64x128xf32>
    %30 = arith.addf %24, %29 : vector<64x128xf32>
    %31 = vector.extract_strided_slice %0 {offsets = [0, 3], sizes = [64, 1], strides = [1, 1]} : vector<64x4xf32> to vector<64x1xf32>
    %32 = vector.extract_strided_slice %11 {offsets = [3, 0], sizes = [1, 128], strides = [1, 1]} : vector<4x128xf32> to vector<1x128xf32>
    %33 = vector.broadcast %31 : vector<64x1xf32> to vector<64x128xf32>
    %34 = vector.broadcast %32 : vector<1x128xf32> to vector<64x128xf32>
    %35 = arith.mulf %33, %34 : vector<64x128xf32>
    %36 = arith.addf %30, %35 : vector<64x128xf32>
    %37 = math.tanh %36 : vector<64x128xf32>
    %cst = arith.constant dense<0.000000e+00> : vector<32x128xf32>
    %38 = tpu.matmul %1, %37, %cst {dimension_numbers = #tpu.dot_dimension_numbers<[1], [0], [0], [1], [0, 0, 1, 1], [], []>} : vector<32x64xf32>, vector<64x128xf32>, vector<32x128xf32> -> vector<32x128xf32>
    %39 = vector.broadcast %5 : vector<32x1xf32> to vector<32x128xf32>
    %40 = arith.addf %38, %39 : vector<32x128xf32>
    %41 = math.tanh %40 : vector<32x128xf32>
    %cst_16 = arith.constant dense<0.000000e+00> : vector<64x128xf32>
    %42 = tpu.matmul %2, %41, %cst_16 {dimension_numbers = #tpu.dot_dimension_numbers<[1], [0], [0], [1], [0, 0, 1, 1], [], []>} : vector<64x32xf32>, vector<32x128xf32>, vector<64x128xf32> -> vector<64x128xf32>
    %43 = vector.broadcast %6 : vector<64x1xf32> to vector<64x128xf32>
    %44 = arith.addf %42, %43 : vector<64x128xf32>
    %45 = math.tanh %44 : vector<64x128xf32>
    %cst_17 = arith.constant dense<0.000000e+00> : vector<5x128xf32>
    %46 = tpu.matmul %3, %45, %cst_17 {dimension_numbers = #tpu.dot_dimension_numbers<[1], [0], [0], [1], [0, 0, 1, 1], [], []>} : vector<5x64xf32>, vector<64x128xf32>, vector<5x128xf32> -> vector<5x128xf32>
    %47 = vector.broadcast %7 : vector<5x1xf32> to vector<5x128xf32>
    %48 = arith.addf %46, %47 : vector<5x128xf32>
    %c0_18 = arith.constant 0 : index
    %49 = arith.index_cast %9 : i32 to index
    %50 = vector.load %arg10[%c0_18, %49] : memref<5x128xf32, #tpu.memory_space<vmem>>, vector<5x128xf32>
    tpu.vector_store %arg10[%c0_18, %49], %48 {strides = array<i32>} : memref<5x128xf32, #tpu.memory_space<vmem>>, vector<5x128xf32>,
    %c1_i32 = arith.constant 1 : i32
    return
  }
  func.func @transform_0(%arg0: i32) -> (i32, i32) {
    %c0_i32 = arith.constant 0 : i32
    %c0_i32_0 = arith.constant 0 : i32
    return %c0_i32, %arg0 : i32, i32
  }
  func.func @transform_1(%arg0: i32) -> (i32, i32) {
    %c0_i32 = arith.constant 0 : i32
    %c0_i32_0 = arith.constant 0 : i32
    %c0_i32_1 = arith.constant 0 : i32
    return %c0_i32, %c0_i32_0 : i32, i32
  }
  func.func @transform_2(%arg0: i32) -> (i32, i32) {
    %c0_i32 = arith.constant 0 : i32
    %c0_i32_0 = arith.constant 0 : i32
    %c0_i32_1 = arith.constant 0 : i32
    return %c0_i32, %c0_i32_0 : i32, i32
  }
  func.func @transform_3(%arg0: i32) -> (i32, i32) {
    %c0_i32 = arith.constant 0 : i32
    %c0_i32_0 = arith.constant 0 : i32
    %c0_i32_1 = arith.constant 0 : i32
    return %c0_i32, %c0_i32_0 : i32, i32
  }
  func.func @transform_4(%arg0: i32) -> (i32, i32) {
    %c0_i32 = arith.constant 0 : i32
    %c0_i32_0 = arith.constant 0 : i32
    %c0_i32_1 = arith.constant 0 : i32
    return %c0_i32, %c0_i32_0 : i32, i32
  }
  func.func @transform_5(%arg0: i32) -> (i32, i32) {
    %c0_i32 = arith.constant 0 : i32
    %c0_i32_0 = arith.constant 0 : i32
    %c0_i32_1 = arith.constant 0 : i32
    return %c0_i32, %c0_i32_0 : i32, i32
  }
  func.func @transform_6(%arg0: i32) -> (i32, i32) {
    %c0_i32 = arith.constant 0 : i32
    %c0_i32_0 = arith.constant 0 : i32
    %c0_i32_1 = arith.constant 0 : i32
    return %c0_i32, %c0_i32_0 : i32, i32
  }
  func.func @transform_7(%arg0: i32) -> (i32, i32) {
    %c0_i32 = arith.constant 0 : i32
    %c0_i32_0 = arith.constant 0 : i32
    %c0_i32_1 = arith.constant 0 : i32
    return %c0_i32, %c0_i32_0 : i32, i32
  }
  func.func @transform_8(%arg0: i32) -> (i32, i32) {
    %c0_i32 = arith.constant 0 : i32
    %c0_i32_0 = arith.constant 0 : i32
    %c0_i32_1 = arith.constant 0 : i32
    return %c0_i32, %c0_i32_0 : i32, i32
  }
  func.func @transform_9(%arg0: i32) -> (i32, i32) {
    %c0_i32 = arith.constant 0 : i32
    %c0_i32_0 = arith.constant 0 : i32
    return %c0_i32, %arg0 : i32, i32
  }
}

</mosaic_0001>

<llo_original>
// kernel: tpu_custom_call.1
$region0: #{tpu_custom_call.1}
  #allocation0 [shape = 'u32[]', space=smem, size = 0x4, offset = 0x4, fixed_abs, tag = 'smem constant byte address 0x4 - core index']
  #allocation1 [shape = 'u32[144,128]{1,0:T(1,128)}', space=vmem, size = 0x12000, scoped, tag = 'internal scratch']
  %s0 = inlined_call_operand.vmem [shape: f32[4,128], index: 0, kind: input, shape index: {}]
  %s1 = inlined_call_operand.vmem [shape: f32[64,4], index: 1, kind: input, shape index: {}]
  %s2 = inlined_call_operand.vmem [shape: f32[64,1], index: 2, kind: input, shape index: {}]
  %s3 = inlined_call_operand.vmem [shape: f32[32,64], index: 3, kind: input, shape index: {}]
  %s4 = inlined_call_operand.vmem [shape: f32[32,1], index: 4, kind: input, shape index: {}]
  %s5 = inlined_call_operand.vmem [shape: f32[64,32], index: 5, kind: input, shape index: {}]
  %s6 = inlined_call_operand.vmem [shape: f32[64,1], index: 6, kind: input, shape index: {}]
  %s7 = inlined_call_operand.vmem [shape: f32[5,64], index: 7, kind: input, shape index: {}]
  %s8 = inlined_call_operand.vmem [shape: f32[5,1], index: 8, kind: input, shape index: {}]
  %s9 = inlined_call_operand.hbm [shape: f32[5,128], index: 9, kind: output, shape index: {}]
  %s10 = sld [smem:[#allocation0]]
  $region46: #{tpu_custom_call.1} parent=0
    _
  %s12 = ssub.s32 1, %s10
  %s13 = scalar_select 0, %s12, %s10
  $region1: #{tpu_custom_call.1} parent=0
    #allocation2 [shape = 'u8[4096]{0}', space=vmem, size = 0x1000, scoped, tag = 'output window, operand 0, single buffered']
    #allocation3 [shape = 's32[1]{0}', space=sflag, size = 0x4, scoped, tag = 'scoped memory for tpu_custom_call.1']
    %14 = vsyncpa [#allocation3], 0
    // Predicated region
    $region2: #{tpu_custom_call.1} parent=1 // pred_check
      _
    $region3: #{tpu_custom_call.1} parent=1 // pred_check_branch
      %16 = sbr.rel (0) target = $region5
    $region4: #{tpu_custom_call.1} parent=1 // pred_region
      _
    $region5: #{tpu_custom_call.1} parent=1 // pred_fallthru
      _
    // Predicated region
    $region6: #{tpu_custom_call.1} parent=1 // pred_check
      _
    $region7: #{tpu_custom_call.1} parent=1 // pred_check_branch
      %18 = sbr.rel (0) target = $region9
    $region8: #{tpu_custom_call.1} parent=1 // pred_region
      _
    $region9: #{tpu_custom_call.1} parent=1 // pred_fallthru
      _
    // Predicated region
    $region10: #{tpu_custom_call.1} parent=1 // pred_check
      _
    $region11: #{tpu_custom_call.1} parent=1 // pred_check_branch
      %20 = sbr.rel (0) target = $region13
    $region12: #{tpu_custom_call.1} parent=1 // pred_region
      _
    $region13: #{tpu_custom_call.1} parent=1 // pred_fallthru
      _
    // Predicated region
    $region14: #{tpu_custom_call.1} parent=1 // pred_check
      _
    $region15: #{tpu_custom_call.1} parent=1 // pred_check_branch
      %22 = sbr.rel (0) target = $region17
    $region16: #{tpu_custom_call.1} parent=1 // pred_region
      _
    $region17: #{tpu_custom_call.1} parent=1 // pred_fallthru
      _
    // Predicated region
    $region18: #{tpu_custom_call.1} parent=1 // pred_check
      _
    $region19: #{tpu_custom_call.1} parent=1 // pred_check_branch
      %24 = sbr.rel (0) target = $region21
    $region20: #{tpu_custom_call.1} parent=1 // pred_region
      _
    $region21: #{tpu_custom_call.1} parent=1 // pred_fallthru
      _
    // Predicated region
    $region22: #{tpu_custom_call.1} parent=1 // pred_check
      _
    $region23: #{tpu_custom_call.1} parent=1 // pred_check_branch
      %26 = sbr.rel (0) target = $region25
    $region24: #{tpu_custom_call.1} parent=1 // pred_region
      _
    $region25: #{tpu_custom_call.1} parent=1 // pred_fallthru
      _
    // Predicated region
    $region26: #{tpu_custom_call.1} parent=1 // pred_check
      _
    $region27: #{tpu_custom_call.1} parent=1 // pred_check_branch
      %28 = sbr.rel (0) target = $region29
    $region28: #{tpu_custom_call.1} parent=1 // pred_region
      _
    $region29: #{tpu_custom_call.1} parent=1 // pred_fallthru
      _
    // Predicated region
    $region30: #{tpu_custom_call.1} parent=1 // pred_check
      _
    $region31: #{tpu_custom_call.1} parent=1 // pred_check_branch
      %30 = sbr.rel (0) target = $region33
    $region32: #{tpu_custom_call.1} parent=1 // pred_region
      _
    $region33: #{tpu_custom_call.1} parent=1 // pred_fallthru
      _
    // Predicated region
    $region34: #{tpu_custom_call.1} parent=1 // pred_check
      _
    $region35: #{tpu_custom_call.1} parent=1 // pred_check_branch
      %32 = sbr.rel (0) target = $region37
    $region36: #{tpu_custom_call.1} parent=1 // pred_region
      _
    $region37: #{tpu_custom_call.1} parent=1 // pred_fallthru
      _
    %v33 = vld [vmem:[%s1] sm:$0xff]
    %v34 = vld [vmem:[%s1 + $0x8] sm:$0xff]
    %v35 = vld [vmem:[%s1 + $0x10] sm:$0xff]
    %v36 = vld [vmem:[%s1 + $0x18] sm:$0xff]
    %v37 = vld [vmem:[%s1 + $0x20] sm:$0xff]
    %v38 = vld [vmem:[%s1 + $0x28] sm:$0xff]
    %v39 = vld [vmem:[%s1 + $0x30] sm:$0xff]
    %v40 = vld [vmem:[%s1 + $0x38] sm:$0xff]
    %v41 = vld [vmem:[%s3] sm:$0xff]
    %v42 = vld [vmem:[%s3 + $0x8] sm:$0xff]
    %v43 = vld [vmem:[%s3 + $0x10] sm:$0xff]
    %v44 = vld [vmem:[%s3 + $0x18] sm:$0xff]
    %v45 = vld [vmem:[%s5] sm:$0xff]
    %v46 = vld [vmem:[%s5 + $0x8] sm:$0xff]
    %v47 = vld [vmem:[%s5 + $0x10] sm:$0xff]
    %v48 = vld [vmem:[%s5 + $0x18] sm:$0xff]
    %v49 = vld [vmem:[%s5 + $0x20] sm:$0xff]
    %v50 = vld [vmem:[%s5 + $0x28] sm:$0xff]
    %v51 = vld [vmem:[%s5 + $0x30] sm:$0xff]
    %v52 = vld [vmem:[%s5 + $0x38] sm:$0xff]
    %v53 = vld [vmem:[%s7] sm:$0x1f]
    %v54 = vld [vmem:[%s2] sm:$0xff]
    %v55 = vld [vmem:[%s2 + $0x8] sm:$0xff]
    %v56 = vld [vmem:[%s2 + $0x10] sm:$0xff]
    %v57 = vld [vmem:[%s2 + $0x18] sm:$0xff]
    %v58 = vld [vmem:[%s2 + $0x20] sm:$0xff]
    %v59 = vld [vmem:[%s2 + $0x28] sm:$0xff]
    %v60 = vld [vmem:[%s2 + $0x30] sm:$0xff]
    %v61 = vld [vmem:[%s2 + $0x38] sm:$0xff]
    %v62 = vld [vmem:[%s4] sm:$0xff]
    %v63 = vld [vmem:[%s4 + $0x8] sm:$0xff]
    %v64 = vld [vmem:[%s4 + $0x10] sm:$0xff]
    %v65 = vld [vmem:[%s4 + $0x18] sm:$0xff]
    %v66 = vld [vmem:[%s6] sm:$0xff]
    %v67 = vld [vmem:[%s6 + $0x8] sm:$0xff]
    %v68 = vld [vmem:[%s6 + $0x10] sm:$0xff]
    %v69 = vld [vmem:[%s6 + $0x18] sm:$0xff]
    %v70 = vld [vmem:[%s6 + $0x20] sm:$0xff]
    %v71 = vld [vmem:[%s6 + $0x28] sm:$0xff]
    %v72 = vld [vmem:[%s6 + $0x30] sm:$0xff]
    %v73 = vld [vmem:[%s6 + $0x38] sm:$0xff]
    %v74 = vld [vmem:[%s8] sm:$0x1f]
    %v75 = vld [vmem:[%s0] sm:$0xf]
    %77 = vset.pattern.permute.xlu0 0
    %78 = vperm.xlu0 %77, %v33
    %v79 = vpop.permute.xlu0 %78
    %82 = vset.pattern.permute.xlu0 0
    %83 = vperm.xlu0 %82, %v34
    %v84 = vpop.permute.xlu0 %83
    %87 = vset.pattern.permute.xlu0 0
    %88 = vperm.xlu0 %87, %v35
    %v89 = vpop.permute.xlu0 %88
    %92 = vset.pattern.permute.xlu0 0
    %93 = vperm.xlu0 %92, %v36
    %v94 = vpop.permute.xlu0 %93
    %97 = vset.pattern.permute.xlu0 0
    %98 = vperm.xlu0 %97, %v37
    %v99 = vpop.permute.xlu0 %98
    %102 = vset.pattern.permute.xlu0 0
    %103 = vperm.xlu0 %102, %v38
    %v104 = vpop.permute.xlu0 %103
    %107 = vset.pattern.permute.xlu0 0
    %108 = vperm.xlu0 %107, %v39
    %v109 = vpop.permute.xlu0 %108
    %112 = vset.pattern.permute.xlu0 0
    %113 = vperm.xlu0 %112, %v40
    %v114 = vpop.permute.xlu0 %113
    %v116 = vlaneseq
    %v117 = vshrl.u32 %v116, 7
    %v118 = vsub.s32 0, %v117
    %v119 = vrot.slane %v75, %v118
    %v120 = vmul.f32 %v79, %v119
    %v121 = vmul.f32 %v84, %v119
    %v122 = vmul.f32 %v89, %v119
    %v123 = vmul.f32 %v94, %v119
    %v124 = vmul.f32 %v99, %v119
    %v125 = vmul.f32 %v104, %v119
    %v126 = vmul.f32 %v109, %v119
    %v127 = vmul.f32 %v114, %v119
    %129 = vset.pattern.permute.xlu0 0
    %130 = vperm.xlu0 %129, %v54
    %v131 = vpop.permute.xlu0 %130
    %134 = vset.pattern.permute.xlu0 0
    %135 = vperm.xlu0 %134, %v55
    %v136 = vpop.permute.xlu0 %135
    %139 = vset.pattern.permute.xlu0 0
    %140 = vperm.xlu0 %139, %v56
    %v141 = vpop.permute.xlu0 %140
    %144 = vset.pattern.permute.xlu0 0
    %145 = vperm.xlu0 %144, %v57
    %v146 = vpop.permute.xlu0 %145
    %149 = vset.pattern.permute.xlu0 0
    %150 = vperm.xlu0 %149, %v58
    %v151 = vpop.permute.xlu0 %150
    %154 = vset.pattern.permute.xlu0 0
    %155 = vperm.xlu0 %154, %v59
    %v156 = vpop.permute.xlu0 %155
    %159 = vset.pattern.permute.xlu0 0
    %160 = vperm.xlu0 %159, %v60
    %v161 = vpop.permute.xlu0 %160
    %164 = vset.pattern.permute.xlu0 0
    %165 = vperm.xlu0 %164, %v61
    %v166 = vpop.permute.xlu0 %165
    %v168 = vadd.f32 %v131, %v120
    %v169 = vadd.f32 %v136, %v121
    %v170 = vadd.f32 %v141, %v122
    %v171 = vadd.f32 %v146, %v123
    %v172 = vadd.f32 %v151, %v124
    %v173 = vadd.f32 %v156, %v125
    %v174 = vadd.f32 %v161, %v126
    %v175 = vadd.f32 %v166, %v127
    %176 = vset.pattern.permute.xlu0 1
    %177 = vperm.xlu0 %176, %v33
    %v178 = vpop.permute.xlu0 %177
    %180 = vset.pattern.permute.xlu0 1
    %181 = vperm.xlu0 %180, %v34
    %v182 = vpop.permute.xlu0 %181
    %184 = vset.pattern.permute.xlu0 1
    %185 = vperm.xlu0 %184, %v35
    %v186 = vpop.permute.xlu0 %185
    %188 = vset.pattern.permute.xlu0 1
    %189 = vperm.xlu0 %188, %v36
    %v190 = vpop.permute.xlu0 %189
    %192 = vset.pattern.permute.xlu0 1
    %193 = vperm.xlu0 %192, %v37
    %v194 = vpop.permute.xlu0 %193
    %196 = vset.pattern.permute.xlu0 1
    %197 = vperm.xlu0 %196, %v38
    %v198 = vpop.permute.xlu0 %197
    %200 = vset.pattern.permute.xlu0 1
    %201 = vperm.xlu0 %200, %v39
    %v202 = vpop.permute.xlu0 %201
    %204 = vset.pattern.permute.xlu0 1
    %205 = vperm.xlu0 %204, %v40
    %v206 = vpop.permute.xlu0 %205
    %v208 = vlaneseq
    %v209 = vshrl.u32 %v208, 7
    %v210 = vsub.s32 1, %v209
    %v211 = vrot.slane %v75, %v210
    %v212 = vmul.f32 %v178, %v211
    %v213 = vmul.f32 %v182, %v211
    %v214 = vmul.f32 %v186, %v211
    %v215 = vmul.f32 %v190, %v211
    %v216 = vmul.f32 %v194, %v211
    %v217 = vmul.f32 %v198, %v211
    %v218 = vmul.f32 %v202, %v211
    %v219 = vmul.f32 %v206, %v211
    %v220 = vadd.f32 %v168, %v212
    %v221 = vadd.f32 %v169, %v213
    %v222 = vadd.f32 %v170, %v214
    %v223 = vadd.f32 %v171, %v215
    %v224 = vadd.f32 %v172, %v216
    %v225 = vadd.f32 %v173, %v217
    %v226 = vadd.f32 %v174, %v218
    %v227 = vadd.f32 %v175, %v219
    %228 = vset.pattern.permute.xlu0 2
    %229 = vperm.xlu0 %228, %v33
    %v230 = vpop.permute.xlu0 %229
    %232 = vset.pattern.permute.xlu0 2
    %233 = vperm.xlu0 %232, %v34
    %v234 = vpop.permute.xlu0 %233
    %236 = vset.pattern.permute.xlu0 2
    %237 = vperm.xlu0 %236, %v35
    %v238 = vpop.permute.xlu0 %237
    %240 = vset.pattern.permute.xlu0 2
    %241 = vperm.xlu0 %240, %v36
    %v242 = vpop.permute.xlu0 %241
    %244 = vset.pattern.permute.xlu0 2
    %245 = vperm.xlu0 %244, %v37
    %v246 = vpop.permute.xlu0 %245
    %248 = vset.pattern.permute.xlu0 2
    %249 = vperm.xlu0 %248, %v38
    %v250 = vpop.permute.xlu0 %249
    %252 = vset.pattern.permute.xlu0 2
    %253 = vperm.xlu0 %252, %v39
    %v254 = vpop.permute.xlu0 %253
    %256 = vset.pattern.permute.xlu0 2
    %257 = vperm.xlu0 %256, %v40
    %v258 = vpop.permute.xlu0 %257
    %v260 = vlaneseq
    %v261 = vshrl.u32 %v260, 7
    %v262 = vsub.s32 2, %v261
    %v263 = vrot.slane %v75, %v262
    %v264 = vmul.f32 %v230, %v263
    %v265 = vmul.f32 %v234, %v263
    %v266 = vmul.f32 %v238, %v263
    %v267 = vmul.f32 %v242, %v263
    %v268 = vmul.f32 %v246, %v263
    %v269 = vmul.f32 %v250, %v263
    %v270 = vmul.f32 %v254, %v263
    %v271 = vmul.f32 %v258, %v263
    %v272 = vadd.f32 %v220, %v264
    %v273 = vadd.f32 %v221, %v265
    %v274 = vadd.f32 %v222, %v266
    %v275 = vadd.f32 %v223, %v267
    %v276 = vadd.f32 %v224, %v268
    %v277 = vadd.f32 %v225, %v269
    %v278 = vadd.f32 %v226, %v270
    %v279 = vadd.f32 %v227, %v271
    %280 = vset.pattern.permute.xlu0 3
    %281 = vperm.xlu0 %280, %v33
    %v282 = vpop.permute.xlu0 %281
    %284 = vset.pattern.permute.xlu0 3
    %285 = vperm.xlu0 %284, %v34
    %v286 = vpop.permute.xlu0 %285
    %288 = vset.pattern.permute.xlu0 3
    %289 = vperm.xlu0 %288, %v35
    %v290 = vpop.permute.xlu0 %289
    %292 = vset.pattern.permute.xlu0 3
    %293 = vperm.xlu0 %292, %v36
    %v294 = vpop.permute.xlu0 %293
    %296 = vset.pattern.permute.xlu0 3
    %297 = vperm.xlu0 %296, %v37
    %v298 = vpop.permute.xlu0 %297
    %300 = vset.pattern.permute.xlu0 3
    %301 = vperm.xlu0 %300, %v38
    %v302 = vpop.permute.xlu0 %301
    %304 = vset.pattern.permute.xlu0 3
    %305 = vperm.xlu0 %304, %v39
    %v306 = vpop.permute.xlu0 %305
    %308 = vset.pattern.permute.xlu0 3
    %309 = vperm.xlu0 %308, %v40
    %v310 = vpop.permute.xlu0 %309
    %v312 = vlaneseq
    %v313 = vshrl.u32 %v312, 7
    %v314 = vsub.s32 3, %v313
    %v315 = vrot.slane %v75, %v314
    %v316 = vmul.f32 %v282, %v315
    %v317 = vmul.f32 %v286, %v315
    %v318 = vmul.f32 %v290, %v315
    %v319 = vmul.f32 %v294, %v315
    %v320 = vmul.f32 %v298, %v315
    %v321 = vmul.f32 %v302, %v315
    %v322 = vmul.f32 %v306, %v315
    %v323 = vmul.f32 %v310, %v315
    %v324 = vadd.f32 %v272, %v316
    %v325 = vadd.f32 %v273, %v317
    %v326 = vadd.f32 %v274, %v318
    %v327 = vadd.f32 %v275, %v319
    %v328 = vadd.f32 %v276, %v320
    %v329 = vadd.f32 %v277, %v321
    %v330 = vadd.f32 %v278, %v322
    %v331 = vadd.f32 %v279, %v323
    %v332 = vtanh.pop %v324
    %v333 = vtanh.pop %v325
    %v334 = vtanh.pop %v326
    %v335 = vtanh.pop %v327
    %v336 = vtanh.pop %v328
    %v337 = vtanh.pop %v329
    %v338 = vtanh.pop %v330
    %v339 = vtanh.pop %v331
    %341 = vset.pattern.permute.xlu0 0
    %342 = vperm.xlu0 %341, %v62
    %v343 = vpop.permute.xlu0 %342
    %346 = vset.pattern.permute.xlu0 0
    %347 = vperm.xlu0 %346, %v63
    %v348 = vpop.permute.xlu0 %347
    %351 = vset.pattern.permute.xlu0 0
    %352 = vperm.xlu0 %351, %v64
    %v353 = vpop.permute.xlu0 %352
    %356 = vset.pattern.permute.xlu0 0
    %357 = vperm.xlu0 %356, %v65
    %v358 = vpop.permute.xlu0 %357
    %vm360 = vcmask 523264
    %v362 = vsel %vm360, %v41, 0
    %v365 = vsel %vm360, %v42, 0
    %v368 = vsel %vm360, %v43, 0
    %v371 = vsel %vm360, %v44, 0
    %373 = vmatprep.subr.mxu0 0.0
    %374 = vmatpush1.msra.mxu0 %v332
    %375 = vmatprep.subr.mxu0 0.0
    %376 = vmatpush1.msra.mxu0 %v333
    %377 = vmatprep.subr.mxu0 0.0
    %378 = vmatpush1.msra.mxu0 %v334
    %379 = vmatprep.subr.mxu0 0.0
    %380 = vmatpush1.msra.mxu0 %v335
    %381 = vmatprep.subr.mxu0 0.0
    %382 = vmatpush1.msra.mxu0 %v336
    %383 = vmatprep.subr.mxu0 0.0
    %384 = vmatpush1.msra.mxu0 %v337
    %385 = vmatprep.subr.mxu0 0.0
    %386 = vmatpush1.msra.mxu0 %v338
    %387 = vmatprep.subr.mxu0 0.0
    %388 = vmatpush1.msra.mxu0 %v339
    %389 = vmatprep.subr.mxu0 0.0
    %390 = vmatpush1.msra.mxu0 0.0
    %391 = vmatprep.subr.mxu0 0.0
    %392 = vmatpush1.msra.mxu0 0.0
    %393 = vmatprep.subr.mxu0 0.0
    %394 = vmatpush1.msra.mxu0 0.0
    %395 = vmatprep.subr.mxu0 0.0
    %396 = vmatpush1.msra.mxu0 0.0
    %397 = vmatprep.subr.mxu0 0.0
    %398 = vmatpush1.msra.mxu0 0.0
    %399 = vmatprep.subr.mxu0 0.0
    %400 = vmatpush1.msra.mxu0 0.0
    %401 = vmatprep.subr.mxu0 0.0
    %402 = vmatpush1.msra.mxu0 0.0
    %403 = vmatprep.subr.mxu0 0.0
    %404 = vmatpush1.msra.mxu0 0.0
    %405 = vmatprep.subr.mxu0 0.0
    %406 = vmatpush1.msra.mxu0 0.0
    %407 = vmatprep.subr.mxu0 0.0
    %408 = vmatpush1.msra.mxu0 0.0
    %409 = vmatprep.subr.mxu0 0.0
    %410 = vmatpush1.msra.mxu0 0.0
    %411 = vmatprep.subr.mxu0 0.0
    %412 = vmatpush1.msra.mxu0 0.0
    %413 = vmatprep.subr.mxu0 0.0
    %414 = vmatpush1.msra.mxu0 0.0
    %415 = vmatprep.subr.mxu0 0.0
    %416 = vmatpush1.msra.mxu0 0.0
    %417 = vmatprep.subr.mxu0 0.0
    %418 = vmatpush1.msra.mxu0 0.0
    %419 = vmatprep.subr.mxu0 0.0
    %420 = vmatpush1.msra.mxu0 0.0
    %421 = vmatprep.subr.mxu0 0.0
    %422 = vmatpush1.msra.mxu0 0.0
    %423 = vmatprep.subr.mxu0 0.0
    %424 = vmatpush1.msra.mxu0 0.0
    %425 = vmatprep.subr.mxu0 0.0
    %426 = vmatpush1.msra.mxu0 0.0
    %427 = vmatprep.subr.mxu0 0.0
    %428 = vmatpush1.msra.mxu0 0.0
    %429 = vmatprep.subr.mxu0 0.0
    %430 = vmatpush1.msra.mxu0 0.0
    %431 = vmatprep.subr.mxu0 0.0
    %432 = vmatpush1.msra.mxu0 0.0
    %433 = vmatprep.subr.mxu0 0.0
    %434 = vmatpush1.msra.mxu0 0.0
    %435 = vmatprep.subr.mxu0 0.0
    %436 = vmatpush1.msra.mxu0 0.0
    %437 = vmatprep.mubr.f32.mxu0 0.0
    %438 = vmatmul.mubr.f32.gmra.mrb[0].mxu0 %v362
    %v439 = vpop.f32.mrb[0].mxu0
    %v440 = vadd.f32 %v343, %v439
    %v441 = vpop.f32.mrb[0].mxu0
    %442 = vmatprep.mubr.f32.mxu0 0.0
    %443 = vmatmul.mubr.f32.gmra.mrb[0].mxu0 %v365
    %v444 = vpop.f32.mrb[0].mxu0
    %v445 = vadd.f32 %v348, %v444
    %v446 = vpop.f32.mrb[0].mxu0
    %447 = vmatprep.mubr.f32.mxu0 0.0
    %448 = vmatmul.mubr.f32.gmra.mrb[0].mxu0 %v368
    %v449 = vpop.f32.mrb[0].mxu0
    %v450 = vadd.f32 %v353, %v449
    %v451 = vpop.f32.mrb[0].mxu0
    %452 = vmatprep.mubr.f32.mxu0 0.0
    %453 = vmatmul.mubr.f32.gmra.mrb[0].mxu0 %v371
    %v454 = vpop.f32.mrb[0].mxu0
    %v455 = vadd.f32 %v358, %v454
    %v456 = vpop.f32.mrb[0].mxu0
    %457 = vdwg.mxu0
    %v458 = vtanh.pop %v440
    %v459 = vtanh.pop %v445
    %v460 = vtanh.pop %v450
    %v461 = vtanh.pop %v455
    %463 = vset.pattern.permute.xlu0 0
    %464 = vperm.xlu0 %463, %v66
    %v465 = vpop.permute.xlu0 %464
    %468 = vset.pattern.permute.xlu0 0
    %469 = vperm.xlu0 %468, %v67
    %v470 = vpop.permute.xlu0 %469
    %473 = vset.pattern.permute.xlu0 0
    %474 = vperm.xlu0 %473, %v68
    %v475 = vpop.permute.xlu0 %474
    %478 = vset.pattern.permute.xlu0 0
    %479 = vperm.xlu0 %478, %v69
    %v480 = vpop.permute.xlu0 %479
    %483 = vset.pattern.permute.xlu0 0
    %484 = vperm.xlu0 %483, %v70
    %v485 = vpop.permute.xlu0 %484
    %488 = vset.pattern.permute.xlu0 0
    %489 = vperm.xlu0 %488, %v71
    %v490 = vpop.permute.xlu0 %489
    %493 = vset.pattern.permute.xlu0 0
    %494 = vperm.xlu0 %493, %v72
    %v495 = vpop.permute.xlu0 %494
    %498 = vset.pattern.permute.xlu0 0
    %499 = vperm.xlu0 %498, %v73
    %v500 = vpop.permute.xlu0 %499
    %vm502 = vcmask 261120
    %v504 = vsel %vm502, %v45, 0
    %v507 = vsel %vm502, %v46, 0
    %v510 = vsel %vm502, %v47, 0
    %v513 = vsel %vm502, %v48, 0
    %v516 = vsel %vm502, %v49, 0
    %v519 = vsel %vm502, %v50, 0
    %v522 = vsel %vm502, %v51, 0
    %v525 = vsel %vm502, %v52, 0
    %527 = vmatprep.subr.mxu0 0.0
    %528 = vmatpush1.msra.mxu0 %v458
    %529 = vmatprep.subr.mxu0 0.0
    %530 = vmatpush1.msra.mxu0 %v459
    %531 = vmatprep.subr.mxu0 0.0
    %532 = vmatpush1.msra.mxu0 %v460
    %533 = vmatprep.subr.mxu0 0.0
    %534 = vmatpush1.msra.mxu0 %v461
    %535 = vmatprep.subr.mxu0 0.0
    %536 = vmatpush1.msra.mxu0 0.0
    %537 = vmatprep.subr.mxu0 0.0
    %538 = vmatpush1.msra.mxu0 0.0
    %539 = vmatprep.subr.mxu0 0.0
    %540 = vmatpush1.msra.mxu0 0.0
    %541 = vmatprep.subr.mxu0 0.0
    %542 = vmatpush1.msra.mxu0 0.0
    %543 = vmatprep.subr.mxu0 0.0
    %544 = vmatpush1.msra.mxu0 0.0
    %545 = vmatprep.subr.mxu0 0.0
    %546 = vmatpush1.msra.mxu0 0.0
    %547 = vmatprep.subr.mxu0 0.0
    %548 = vmatpush1.msra.mxu0 0.0
    %549 = vmatprep.subr.mxu0 0.0
    %550 = vmatpush1.msra.mxu0 0.0
    %551 = vmatprep.subr.mxu0 0.0
    %552 = vmatpush1.msra.mxu0 0.0
    %553 = vmatprep.subr.mxu0 0.0
    %554 = vmatpush1.msra.mxu0 0.0
    %555 = vmatprep.subr.mxu0 0.0
    %556 = vmatpush1.msra.mxu0 0.0
    %557 = vmatprep.subr.mxu0 0.0
    %558 = vmatpush1.msra.mxu0 0.0
    %559 = vmatprep.subr.mxu0 0.0
    %560 = vmatpush1.msra.mxu0 0.0
    %561 = vmatprep.subr.mxu0 0.0
    %562 = vmatpush1.msra.mxu0 0.0
    %563 = vmatprep.subr.mxu0 0.0
    %564 = vmatpush1.msra.mxu0 0.0
    %565 = vmatprep.subr.mxu0 0.0
    %566 = vmatpush1.msra.mxu0 0.0
    %567 = vmatprep.subr.mxu0 0.0
    %568 = vmatpush1.msra.mxu0 0.0
    %569 = vmatprep.subr.mxu0 0.0
    %570 = vmatpush1.msra.mxu0 0.0
    %571 = vmatprep.subr.mxu0 0.0
    %572 = vmatpush1.msra.mxu0 0.0
    %573 = vmatprep.subr.mxu0 0.0
    %574 = vmatpush1.msra.mxu0 0.0
    %575 = vmatprep.subr.mxu0 0.0
    %576 = vmatpush1.msra.mxu0 0.0
    %577 = vmatprep.subr.mxu0 0.0
    %578 = vmatpush1.msra.mxu0 0.0
    %579 = vmatprep.subr.mxu0 0.0
    %580 = vmatpush1.msra.mxu0 0.0
    %581 = vmatprep.subr.mxu0 0.0
    %582 = vmatpush1.msra.mxu0 0.0
    %583 = vmatprep.subr.mxu0 0.0
    %584 = vmatpush1.msra.mxu0 0.0
    %585 = vmatprep.subr.mxu0 0.0
    %586 = vmatpush1.msra.mxu0 0.0
    %587 = vmatprep.subr.mxu0 0.0
    %588 = vmatpush1.msra.mxu0 0.0
    %589 = vmatprep.subr.mxu0 0.0
    %590 = vmatpush1.msra.mxu0 0.0
    %591 = vmatprep.mubr.f32.mxu0 0.0
    %592 = vmatmul.mubr.f32.gmra.mrb[0].mxu0 %v504
    %v593 = vpop.f32.mrb[0].mxu0
    %v594 = vadd.f32 %v465, %v593
    %v595 = vpop.f32.mrb[0].mxu0
    %596 = vmatprep.mubr.f32.mxu0 0.0
    %597 = vmatmul.mubr.f32.gmra.mrb[0].mxu0 %v507
    %v598 = vpop.f32.mrb[0].mxu0
    %v599 = vadd.f32 %v470, %v598
    %v600 = vpop.f32.mrb[0].mxu0
    %601 = vmatprep.mubr.f32.mxu0 0.0
    %602 = vmatmul.mubr.f32.gmra.mrb[0].mxu0 %v510
    %v603 = vpop.f32.mrb[0].mxu0
    %v604 = vadd.f32 %v475, %v603
    %v605 = vpop.f32.mrb[0].mxu0
    %606 = vmatprep.mubr.f32.mxu0 0.0
    %607 = vmatmul.mubr.f32.gmra.mrb[0].mxu0 %v513
    %v608 = vpop.f32.mrb[0].mxu0
    %v609 = vadd.f32 %v480, %v608
    %v610 = vpop.f32.mrb[0].mxu0
    %611 = vmatprep.mubr.f32.mxu0 0.0
    %612 = vmatmul.mubr.f32.gmra.mrb[0].mxu0 %v516
    %v613 = vpop.f32.mrb[0].mxu0
    %v614 = vadd.f32 %v485, %v613
    %v615 = vpop.f32.mrb[0].mxu0
    %616 = vmatprep.mubr.f32.mxu0 0.0
    %617 = vmatmul.mubr.f32.gmra.mrb[0].mxu0 %v519
    %v618 = vpop.f32.mrb[0].mxu0
    %v619 = vadd.f32 %v490, %v618
    %v620 = vpop.f32.mrb[0].mxu0
    %621 = vmatprep.mubr.f32.mxu0 0.0
    %622 = vmatmul.mubr.f32.gmra.mrb[0].mxu0 %v522
    %v623 = vpop.f32.mrb[0].mxu0
    %v624 = vadd.f32 %v495, %v623
    %v625 = vpop.f32.mrb[0].mxu0
    %626 = vmatprep.mubr.f32.mxu0 0.0
    %627 = vmatmul.mubr.f32.gmra.mrb[0].mxu0 %v525
    %v628 = vpop.f32.mrb[0].mxu0
    %v629 = vadd.f32 %v500, %v628
    %v630 = vpop.f32.mrb[0].mxu0
    %631 = vdwg.mxu0
    %v632 = vtanh.pop %v594
    %v633 = vtanh.pop %v599
    %v634 = vtanh.pop %v604
    %v635 = vtanh.pop %v609
    %v636 = vtanh.pop %v614
    %v637 = vtanh.pop %v619
    %v638 = vtanh.pop %v624
    %v639 = vtanh.pop %v629
    %641 = vset.pattern.permute.xlu0 0
    %642 = vperm.xlu0 %641, %v74
    %v643 = vpop.permute.xlu0 %642
    %v646 = vsel %vm360, %v53, 0
    %648 = vmatprep.subr.mxu0 0.0
    %649 = vmatpush1.msra.mxu0 %v632
    %650 = vmatprep.subr.mxu0 0.0
    %651 = vmatpush1.msra.mxu0 %v633
    %652 = vmatprep.subr.mxu0 0.0
    %653 = vmatpush1.msra.mxu0 %v634
    %654 = vmatprep.subr.mxu0 0.0
    %655 = vmatpush1.msra.mxu0 %v635
    %656 = vmatprep.subr.mxu0 0.0
    %657 = vmatpush1.msra.mxu0 %v636
    %658 = vmatprep.subr.mxu0 0.0
    %659 = vmatpush1.msra.mxu0 %v637
    %660 = vmatprep.subr.mxu0 0.0
    %661 = vmatpush1.msra.mxu0 %v638
    %662 = vmatprep.subr.mxu0 0.0
    %663 = vmatpush1.msra.mxu0 %v639
    %664 = vmatprep.subr.mxu0 0.0
    %665 = vmatpush1.msra.mxu0 0.0
    %666 = vmatprep.subr.mxu0 0.0
    %667 = vmatpush1.msra.mxu0 0.0
    %668 = vmatprep.subr.mxu0 0.0
    %669 = vmatpush1.msra.mxu0 0.0
    %670 = vmatprep.subr.mxu0 0.0
    %671 = vmatpush1.msra.mxu0 0.0
    %672 = vmatprep.subr.mxu0 0.0
    %673 = vmatpush1.msra.mxu0 0.0
    %674 = vmatprep.subr.mxu0 0.0
    %675 = vmatpush1.msra.mxu0 0.0
    %676 = vmatprep.subr.mxu0 0.0
    %677 = vmatpush1.msra.mxu0 0.0
    %678 = vmatprep.subr.mxu0 0.0
    %679 = vmatpush1.msra.mxu0 0.0
    %680 = vmatprep.subr.mxu0 0.0
    %681 = vmatpush1.msra.mxu0 0.0
    %682 = vmatprep.subr.mxu0 0.0
    %683 = vmatpush1.msra.mxu0 0.0
    %684 = vmatprep.subr.mxu0 0.0
    %685 = vmatpush1.msra.mxu0 0.0
    %686 = vmatprep.subr.mxu0 0.0
    %687 = vmatpush1.msra.mxu0 0.0
    %688 = vmatprep.subr.mxu0 0.0
    %689 = vmatpush1.msra.mxu0 0.0
    %690 = vmatprep.subr.mxu0 0.0
    %691 = vmatpush1.msra.mxu0 0.0
    %692 = vmatprep.subr.mxu0 0.0
    %693 = vmatpush1.msra.mxu0 0.0
    %694 = vmatprep.subr.mxu0 0.0
    %695 = vmatpush1.msra.mxu0 0.0
    %696 = vmatprep.subr.mxu0 0.0
    %697 = vmatpush1.msra.mxu0 0.0
    %698 = vmatprep.subr.mxu0 0.0
    %699 = vmatpush1.msra.mxu0 0.0
    %700 = vmatprep.subr.mxu0 0.0
    %701 = vmatpush1.msra.mxu0 0.0
    %702 = vmatprep.subr.mxu0 0.0
    %703 = vmatpush1.msra.mxu0 0.0
    %704 = vmatprep.subr.mxu0 0.0
    %705 = vmatpush1.msra.mxu0 0.0
    %706 = vmatprep.subr.mxu0 0.0
    %707 = vmatpush1.msra.mxu0 0.0
    %708 = vmatprep.subr.mxu0 0.0
    %709 = vmatpush1.msra.mxu0 0.0
    %710 = vmatprep.subr.mxu0 0.0
    %711 = vmatpush1.msra.mxu0 0.0
    %712 = vmatprep.mubr.f32.mxu0 0.0
    %713 = vmatmul.mubr.f32.gmra.mrb[0].mxu0 %v646
    %v714 = vpop.f32.mrb[0].mxu0
    %v715 = vadd.f32 %v643, %v714
    %v716 = vpop.f32.mrb[0].mxu0
    %717 = vdwg.mxu0
    %718 = vst [vmem:[#allocation2] sm:$0x1f] %v715
    // Predicated region
    $region38: #{tpu_custom_call.1} parent=1 // pred_check
      _
    $region39: #{tpu_custom_call.1} parent=1 // pred_check_branch
      %720 = sbr.rel (0) target = $region41
    $region40: #{tpu_custom_call.1} parent=1 // pred_region
      %s722 = ssub.s32 128, 128
      %723 = vsyncadd [#allocation3], %s722
      %s725 = sshll.u32 [#allocation2], 4
      %s726 = int_to_ptr.vmem [resolvable:$true] %s725
      %728 = dma.vmem_to_hbm [thread:$0]  %s726, 128, %s9, [#allocation3]
    $region41: #{tpu_custom_call.1} parent=1 // pred_fallthru
      _
    // Predicated region
    $region42: #{tpu_custom_call.1} parent=1 // pred_check
      _
    $region43: #{tpu_custom_call.1} parent=1 // pred_check_branch
      %730 = sbr.rel (0) target = $region45
    $region44: #{tpu_custom_call.1} parent=1 // pred_region
      %731 = dma.done [#allocation3], 128
    $region45: #{tpu_custom_call.1} parent=1 // pred_fallthru
      _
    %732 = vsyncpa [#allocation3], 1

</llo_original>
